<compile_context>
chip_gen: v5e
topology: v5e:2x2
jax: 0.10.0
libtpu: 0.0.40
codegen_flags: <defaults>
</compile_context>

<pallas_src>
import jax
import jax.numpy as jnp
from jax.experimental import pallas as pl
from jax.experimental.pallas import tpu as pltpu


def _round_up(x, m):
    return ((x + m - 1) // m) * m


def gcn_kernel(inp_ref, adj_ref, w_ref, b_ref, out_ref, acc_ref):
    """One (row-tile i, reduction-tile k) step of  adj @ (inp @ W) + bias."""
    k = pl.program_id(1)

    @pl.when(k == 0)
    def _():
        acc_ref[...] = jnp.zeros_like(acc_ref)

    # support_k = inp[k_tile] @ W   (bf16 operands, f32 accumulation on the MXU)
    support = jnp.dot(inp_ref[...], w_ref[...],
                      preferred_element_type=jnp.float32)
    # acc += adj[i_tile, k_tile] @ support_k
    acc_ref[...] += jnp.dot(adj_ref[...], support.astype(adj_ref.dtype),
                            preferred_element_type=jnp.float32)

    @pl.when(k == pl.num_programs(1) - 1)
    def _():
        out_ref[...] = (acc_ref[...] + b_ref[...]).astype(out_ref.dtype)


def graph_convolution(inp, adj, weight, bias=None, *,
                      tile_m=128, tile_k=128, mxu_dtype=jnp.bfloat16):
    """Pallas GCN layer: adj @ (inp @ weight) + bias.

    inp: [N, F_in], adj: [N, N], weight: [F_in, F_out], bias: [F_out] or None.
    Returns f32 [N, F_out].
    """
    n, f_in = inp.shape
    f_out = weight.shape[1]
    assert adj.shape == (n, n)
    assert weight.shape[0] == f_in

    lane = 128
    n_pad_m = _round_up(n, tile_m)        # adj rows / output rows
    n_pad_k = _round_up(n, tile_k)        # adj cols / inp rows (reduction axis)
    f_in_pad = _round_up(f_in, lane)
    f_out_pad = _round_up(f_out, lane)    # lane-dense output: no masked vst

    # Zero-pad to MXU / lane friendly shapes (zero padding is exact: padded
    # rows/cols contribute nothing and are sliced off at the end).
    inp_p = jnp.pad(inp.astype(mxu_dtype),
                    ((0, n_pad_k - n), (0, f_in_pad - f_in)))
    adj_p = jnp.pad(adj.astype(mxu_dtype),
                    ((0, n_pad_m - n), (0, n_pad_k - n)))
    w_p = jnp.pad(weight.astype(mxu_dtype),
                  ((0, f_in_pad - f_in), (0, f_out_pad - f_out)))
    if bias is None:
        b_p = jnp.zeros((1, f_out_pad), jnp.float32)
    else:
        b_p = jnp.pad(bias.reshape(1, f_out).astype(jnp.float32),
                      ((0, 0), (0, f_out_pad - f_out)))

    grid = (n_pad_m // tile_m, n_pad_k // tile_k)

    # Advisory cost hint for the XLA scheduler.
    flops = (2 * grid[0] * n_pad_k * f_in_pad * f_out_pad   # inp @ W per row tile
             + 2 * n_pad_m * n_pad_k * f_out_pad)           # adj @ support
    bytes_accessed = (inp_p.size * inp_p.dtype.itemsize * grid[0]
                      + adj_p.size * adj_p.dtype.itemsize
                      + w_p.size * w_p.dtype.itemsize * grid[0] * grid[1]
                      + b_p.size * 4
                      + n_pad_m * f_out_pad * 4)

    out_p = pl.pallas_call(
        gcn_kernel,
        out_shape=jax.ShapeDtypeStruct((n_pad_m, f_out_pad), jnp.float32),
        grid_spec=pltpu.PrefetchScalarGridSpec(
            num_scalar_prefetch=0,
            grid=grid,
            in_specs=[
                pl.BlockSpec((tile_k, f_in_pad), lambda i, k: (k, 0)),     # inp
                pl.BlockSpec((tile_m, tile_k), lambda i, k: (i, k)),       # adj
                pl.BlockSpec((f_in_pad, f_out_pad), lambda i, k: (0, 0)),  # W
                pl.BlockSpec((1, f_out_pad), lambda i, k: (0, 0)),         # bias
            ],
            out_specs=pl.BlockSpec((tile_m, f_out_pad), lambda i, k: (i, 0)),
            scratch_shapes=[pltpu.VMEM((tile_m, f_out_pad), jnp.float32)],
        ),
        compiler_params=pltpu.CompilerParams(
            dimension_semantics=("parallel", "arbitrary")),
        cost_estimate=pl.CostEstimate(flops=flops, transcendentals=0,
                                      bytes_accessed=bytes_accessed),
    )(inp_p, adj_p, w_p, b_p)

    return out_p[:n, :f_out]


if __name__ == "__main__":
    # Module config (matches GraphConvolution(in_features, out_features, bias=True))
    N = 64            # number of graph nodes
    IN_FEATURES = 32
    OUT_FEATURES = 16

    key = jax.random.PRNGKey(0)
    k_w, k_b, k_x, k_a = jax.random.split(key, 4)

    # reset_parameters(): weight ~ Normal(0, stdv), bias ~ Uniform(-stdv, stdv),
    # stdv = 1/sqrt(out_features)
    stdv = 1.0 / jnp.sqrt(jnp.float32(OUT_FEATURES))
    weight = stdv * jax.random.normal(k_w, (IN_FEATURES, OUT_FEATURES), jnp.float32)
    bias = jax.random.uniform(k_b, (OUT_FEATURES,), jnp.float32,
                              minval=-stdv, maxval=stdv)

    # Example inputs
    inp = jax.random.normal(k_x, (N, IN_FEATURES), jnp.float32)
    # Simple symmetric row-normalized adjacency-like matrix
    a_raw = jax.random.uniform(k_a, (N, N), jnp.float32)
    adj = (a_raw + a_raw.T) * 0.5
    adj = adj / jnp.sum(adj, axis=1, keepdims=True)

    # Reference in plain JAX (f32)
    ref = adj @ (inp @ weight) + bias[None, :]

    # Default path: bf16 MXU operands, f32 accumulation.
    out = graph_convolution(inp, adj, weight, bias)
    out = jax.block_until_ready(out)
    assert out.shape == (N, OUT_FEATURES)
    assert jnp.allclose(out, ref, atol=3e-2, rtol=3e-2), "bf16 path mismatch vs reference"

    # Full-f32 operand path should match tightly.
    out_f32 = graph_convolution(inp, adj, weight, bias, mxu_dtype=jnp.float32)
    out_f32 = jax.block_until_ready(out_f32)
    assert jnp.allclose(out_f32, ref, atol=1e-4, rtol=1e-4), "f32 path mismatch vs reference"

    print("KERNEL_OK")
</pallas_src>

<mosaic_0001>
module attributes {stable_mosaic.version = 11 : i64} {
  func.func @gcn_kernel(%arg0: i32, %arg1: i32, %arg2: memref<128x128xbf16, #tpu.memory_space<vmem>>, %arg3: memref<128x128xbf16, #tpu.memory_space<vmem>>, %arg4: memref<128x128xbf16, #tpu.memory_space<vmem>>, %arg5: memref<1x128xf32, #tpu.memory_space<vmem>>, %arg6: memref<128x128xf32, #tpu.memory_space<vmem>>, %arg7: memref<128x128xf32, #tpu.memory_space<vmem>>) attributes {dimension_semantics = [#tpu.dimension_semantics<parallel>, #tpu.dimension_semantics<arbitrary>], iteration_bounds = array<i64: 1, 1>, scalar_prefetch = 0 : i64, scratch_operands = 1 : i64, tpu.core_type = #tpu.core_type<tc>, window_params = [{transform_indices = @transform_0, window_bounds = array<i64: 128, 128>}, {transform_indices = @transform_1, window_bounds = array<i64: 128, 128>}, {pipeline_mode = #tpu.pipeline_mode<synchronous>, transform_indices = @transform_2, window_bounds = array<i64: 128, 128>}, {pipeline_mode = #tpu.pipeline_mode<synchronous>, transform_indices = @transform_3, window_bounds = array<i64: 1, 128>}, {transform_indices = @transform_4, window_bounds = array<i64: 128, 128>}]} {
    %c0_i32 = arith.constant 0 : i32
    %0 = arith.cmpi eq, %arg1, %c0_i32 : i32
    %1 = arith.extui %0 : i1 to i32
    %c0_i32_0 = arith.constant 0 : i32
    %2 = arith.cmpi ne, %1, %c0_i32_0 : i32
    scf.if %2 {
      %cst_13 = arith.constant 0.000000e+00 : f32
      %15 = vector.broadcast %cst_13 : f32 to vector<128x128xf32>
      %c0_14 = arith.constant 0 : index
      %c0_15 = arith.constant 0 : index
      %16 = vector.load %arg7[%c0_14, %c0_15] : memref<128x128xf32, #tpu.memory_space<vmem>>, vector<128x128xf32>
      tpu.vector_store %arg7[%c0_14, %c0_15], %15 {strides = array<i32>} : memref<128x128xf32, #tpu.memory_space<vmem>>, vector<128x128xf32>,
    } else {
    }
    %c0 = arith.constant 0 : index
    %c0_1 = arith.constant 0 : index
    %3 = vector.load %arg2[%c0, %c0_1] : memref<128x128xbf16, #tpu.memory_space<vmem>>, vector<128x128xbf16>
    %c0_2 = arith.constant 0 : index
    %c0_3 = arith.constant 0 : index
    %4 = vector.load %arg4[%c0_2, %c0_3] : memref<128x128xbf16, #tpu.memory_space<vmem>>, vector<128x128xbf16>
    %cst = arith.constant dense<0.000000e+00> : vector<128x128xf32>
    %5 = tpu.matmul %3, %4, %cst {dimension_numbers = #tpu.dot_dimension_numbers<[1], [0], [0], [1], [0, 0, 1, 1], [], []>} : vector<128x128xbf16>, vector<128x128xbf16>, vector<128x128xf32> -> vector<128x128xf32>
    %c0_4 = arith.constant 0 : index
    %c0_5 = arith.constant 0 : index
    %6 = vector.load %arg7[%c0_4, %c0_5] : memref<128x128xf32, #tpu.memory_space<vmem>>, vector<128x128xf32>
    %c0_6 = arith.constant 0 : index
    %c0_7 = arith.constant 0 : index
    %7 = vector.load %arg3[%c0_6, %c0_7] : memref<128x128xbf16, #tpu.memory_space<vmem>>, vector<128x128xbf16>
    %8 = arith.truncf %5 : vector<128x128xf32> to vector<128x128xbf16>
    %cst_8 = arith.constant dense<0.000000e+00> : vector<128x128xf32>
    %9 = tpu.matmul %7, %8, %cst_8 {dimension_numbers = #tpu.dot_dimension_numbers<[1], [0], [0], [1], [0, 0, 1, 1], [], []>} : vector<128x128xbf16>, vector<128x128xbf16>, vector<128x128xf32> -> vector<128x128xf32>
    %10 = arith.addf %6, %9 : vector<128x128xf32>
    %c0_9 = arith.constant 0 : index
    %c0_10 = arith.constant 0 : index
    %11 = vector.load %arg7[%c0_9, %c0_10] : memref<128x128xf32, #tpu.memory_space<vmem>>, vector<128x128xf32>
    tpu.vector_store %arg7[%c0_9, %c0_10], %10 {strides = array<i32>} : memref<128x128xf32, #tpu.memory_space<vmem>>, vector<128x128xf32>,
    %c0_i32_11 = arith.constant 0 : i32
    %12 = arith.cmpi eq, %arg1, %c0_i32_11 : i32
    %13 = arith.extui %12 : i1 to i32
    %c0_i32_12 = arith.constant 0 : i32
    %14 = arith.cmpi ne, %13, %c0_i32_12 : i32
    scf.if %14 {
      %c0_13 = arith.constant 0 : index
      %c0_14 = arith.constant 0 : index
      %15 = vector.load %arg7[%c0_13, %c0_14] : memref<128x128xf32, #tpu.memory_space<vmem>>, vector<128x128xf32>
      %c0_15 = arith.constant 0 : index
      %c0_16 = arith.constant 0 : index
      %16 = vector.load %arg5[%c0_15, %c0_16] : memref<1x128xf32, #tpu.memory_space<vmem>>, vector<1x128xf32>
      %17 = vector.broadcast %16 : vector<1x128xf32> to vector<128x128xf32>
      %18 = arith.addf %15, %17 : vector<128x128xf32>
      %c0_17 = arith.constant 0 : index
      %c0_18 = arith.constant 0 : index
      %19 = vector.load %arg6[%c0_17, %c0_18] : memref<128x128xf32, #tpu.memory_space<vmem>>, vector<128x128xf32>
      tpu.vector_store %arg6[%c0_17, %c0_18], %18 {strides = array<i32>} : memref<128x128xf32, #tpu.memory_space<vmem>>, vector<128x128xf32>,
    } else {
    }
    return
  }
  func.func @transform_0(%arg0: i32, %arg1: i32) -> (i32, i32) {
    %c0_i32 = arith.constant 0 : i32
    %c0_i32_0 = arith.constant 0 : i32
    return %arg1, %c0_i32 : i32, i32
  }
  func.func @transform_1(%arg0: i32, %arg1: i32) -> (i32, i32) {
    %c0_i32 = arith.constant 0 : i32
    return %arg0, %arg1 : i32, i32
  }
  func.func @transform_2(%arg0: i32, %arg1: i32) -> (i32, i32) {
    %c0_i32 = arith.constant 0 : i32
    %c0_i32_0 = arith.constant 0 : i32
    %c0_i32_1 = arith.constant 0 : i32
    return %c0_i32, %c0_i32_0 : i32, i32
  }
  func.func @transform_3(%arg0: i32, %arg1: i32) -> (i32, i32) {
    %c0_i32 = arith.constant 0 : i32
    %c0_i32_0 = arith.constant 0 : i32
    %c0_i32_1 = arith.constant 0 : i32
    return %c0_i32, %c0_i32_0 : i32, i32
  }
  func.func @transform_4(%arg0: i32, %arg1: i32) -> (i32, i32) {
    %c0_i32 = arith.constant 0 : i32
    %c0_i32_0 = arith.constant 0 : i32
    return %arg0, %c0_i32 : i32, i32
  }
}

</mosaic_0001>

<llo_original>
// kernel: tpu_custom_call.1
$region0: #{tpu_custom_call.1}
  #allocation0 [shape = 'u32[]', space=smem, size = 0x4, offset = 0x4, fixed_abs, tag = 'smem constant byte address 0x4 - core index']
  #allocation1 [shape = 'u32[72,128]{1,0:T(1,128)}', space=vmem, size = 0x9000, scoped, tag = 'internal scratch']
  #allocation2 [shape = 'f32[128,128]{1,0:T(8,128)}', space=vmem, size = 0x10000, scoped, tag = 'scratch operand']
  %s0 = inlined_call_operand.hbm [shape: bf16[128,128], index: 0, kind: input, shape index: {}]
  %s1 = inlined_call_operand.hbm [shape: bf16[128,128], index: 1, kind: input, shape index: {}]
  %s2 = inlined_call_operand.hbm [shape: bf16[128,128], index: 2, kind: input, shape index: {}]
  %s3 = inlined_call_operand.vmem [shape: f32[1,128], index: 3, kind: input, shape index: {}]
  %s4 = inlined_call_operand.hbm [shape: f32[128,128], index: 4, kind: output, shape index: {}]
  %s5 = sld [smem:[#allocation0]]
  $region46: #{tpu_custom_call.1} parent=0
    _
  %s7 = ssub.s32 1, %s5
  %s8 = scalar_select 0, %s7, %s5
  $region1: #{tpu_custom_call.1} parent=0
    #allocation3 [shape = 'u8[32768]{0}', space=vmem, size = 0x8000, scoped, tag = 'input window, operand 0, single buffered']
    #allocation4 [shape = 's32[1]{0}', space=sflag, size = 0x4, scoped, tag = 'scoped memory for tpu_custom_call.1']
    #allocation5 [shape = 's32[1]{0}', space=sflag, size = 0x4, scoped, tag = 'scoped memory for tpu_custom_call.1']
    #allocation6 [shape = 'u8[32768]{0}', space=vmem, size = 0x8000, scoped, tag = 'input window, operand 1, single buffered']
    #allocation7 [shape = 's32[1]{0}', space=sflag, size = 0x4, scoped, tag = 'scoped memory for tpu_custom_call.1']
    #allocation8 [shape = 'u8[32768]{0}', space=vmem, size = 0x8000, scoped, tag = 'input window, operand 2, single buffered']
    #allocation9 [shape = 'u8[65536]{0}', space=vmem, size = 0x10000, scoped, tag = 'output window, operand 0, single buffered']
    %9 = vsyncpa [#allocation4], 0
    %10 = vsyncpa [#allocation7], 0
    %11 = vsyncpa [#allocation5], 0
    // Predicated region
    $region2: #{tpu_custom_call.1} parent=1 // pred_check
      _
    $region3: #{tpu_custom_call.1} parent=1 // pred_check_branch
      %13 = sbr.rel (0) target = $region5
    $region4: #{tpu_custom_call.1} parent=1 // pred_region
      %15 = vsyncadd [#allocation4], 0
      %s16 = sshll.u32 %s0, 4
      %s17 = int_to_ptr.hbm [resolvable:$true] %s16
      %s18 = sshll.u32 [#allocation3], 4
      %s19 = int_to_ptr.vmem [resolvable:$true] %s18
      %24 = dma.hbm_to_vmem [thread:$0]  %s17, 1024, %s19, [#allocation4], 64, 64, 4
    $region5: #{tpu_custom_call.1} parent=1 // pred_fallthru
      _
    // Predicated region
    $region6: #{tpu_custom_call.1} parent=1 // pred_check
      _
    $region7: #{tpu_custom_call.1} parent=1 // pred_check_branch
      %26 = sbr.rel (0) target = $region9
    $region8: #{tpu_custom_call.1} parent=1 // pred_region
      %28 = vsyncadd [#allocation7], 0
      %s29 = sshll.u32 %s1, 4
      %s30 = int_to_ptr.hbm [resolvable:$true] %s29
      %s31 = sshll.u32 [#allocation6], 4
      %s32 = int_to_ptr.vmem [resolvable:$true] %s31
      %37 = dma.hbm_to_vmem [thread:$0]  %s30, 1024, %s32, [#allocation7], 64, 64, 4
    $region9: #{tpu_custom_call.1} parent=1 // pred_fallthru
      _
    // Predicated region
    $region10: #{tpu_custom_call.1} parent=1 // pred_check
      _
    $region11: #{tpu_custom_call.1} parent=1 // pred_check_branch
      %39 = sbr.rel (0) target = $region13
    $region12: #{tpu_custom_call.1} parent=1 // pred_region
      %41 = vsyncadd [#allocation7], 0
      %s42 = sshll.u32 %s2, 4
      %s43 = int_to_ptr.hbm [resolvable:$true] %s42
      %s44 = sshll.u32 [#allocation8], 4
      %s45 = int_to_ptr.vmem [resolvable:$true] %s44
      %50 = dma.hbm_to_vmem [thread:$0]  %s43, 1024, %s45, [#allocation7], 64, 64, 4
    $region13: #{tpu_custom_call.1} parent=1 // pred_fallthru
      _
    // Predicated region
    $region14: #{tpu_custom_call.1} parent=1 // pred_check
      _
    $region15: #{tpu_custom_call.1} parent=1 // pred_check_branch
      %52 = sbr.rel (0) target = $region17
    $region16: #{tpu_custom_call.1} parent=1 // pred_region
      _
    $region17: #{tpu_custom_call.1} parent=1 // pred_fallthru
      _
    // Predicated region
    $region18: #{tpu_custom_call.1} parent=1 // pred_check
      _
    $region19: #{tpu_custom_call.1} parent=1 // pred_check_branch
      %54 = sbr.rel (0) target = $region21
    $region20: #{tpu_custom_call.1} parent=1 // pred_region
      %56 = dma.done [#allocation4], 1024
    $region21: #{tpu_custom_call.1} parent=1 // pred_fallthru
      _
    // Predicated region
    $region22: #{tpu_custom_call.1} parent=1 // pred_check
      _
    $region23: #{tpu_custom_call.1} parent=1 // pred_check_branch
      %58 = sbr.rel (0) target = $region25
    $region24: #{tpu_custom_call.1} parent=1 // pred_region
      %60 = dma.done [#allocation7], 1024
    $region25: #{tpu_custom_call.1} parent=1 // pred_fallthru
      _
    // Predicated region
    $region26: #{tpu_custom_call.1} parent=1 // pred_check
      _
    $region27: #{tpu_custom_call.1} parent=1 // pred_check_branch
      %62 = sbr.rel (0) target = $region29
    $region28: #{tpu_custom_call.1} parent=1 // pred_region
      %64 = dma.done [#allocation7], 1024
    $region29: #{tpu_custom_call.1} parent=1 // pred_fallthru
      _
    %p65 = scmp.eq.s32.totalorder 0, 0
    // Predicated region
    $region30: #{tpu_custom_call.1} parent=1 // pred_check
      %p66 = pneg %p65
    $region31: #{tpu_custom_call.1} parent=1 // pred_check_branch
      %68 = sbr.rel (%p66) target = $region33
    $region32: #{tpu_custom_call.1} parent=1 // pred_region
      %69 = vst [vmem:[#allocation2] sm:$0xff] 0.0
      %70 = vst [vmem:[#allocation2 + $0x8] sm:$0xff] 0.0
      %71 = vst [vmem:[#allocation2 + $0x10] sm:$0xff] 0.0
      %72 = vst [vmem:[#allocation2 + $0x18] sm:$0xff] 0.0
      %73 = vst [vmem:[#allocation2 + $0x20] sm:$0xff] 0.0
      %74 = vst [vmem:[#allocation2 + $0x28] sm:$0xff] 0.0
      %75 = vst [vmem:[#allocation2 + $0x30] sm:$0xff] 0.0
      %76 = vst [vmem:[#allocation2 + $0x38] sm:$0xff] 0.0
      %77 = vst [vmem:[#allocation2 + $0x40] sm:$0xff] 0.0
      %78 = vst [vmem:[#allocation2 + $0x48] sm:$0xff] 0.0
      %79 = vst [vmem:[#allocation2 + $0x50] sm:$0xff] 0.0
      %80 = vst [vmem:[#allocation2 + $0x58] sm:$0xff] 0.0
      %81 = vst [vmem:[#allocation2 + $0x60] sm:$0xff] 0.0
      %82 = vst [vmem:[#allocation2 + $0x68] sm:$0xff] 0.0
      %83 = vst [vmem:[#allocation2 + $0x70] sm:$0xff] 0.0
      %84 = vst [vmem:[#allocation2 + $0x78] sm:$0xff] 0.0
    $region33: #{tpu_custom_call.1} parent=1 // pred_fallthru
      _
    %v85 = vld [vmem:[#allocation3] sm:$0xf]
    %v86 = vld [vmem:[#allocation3 + $0x4] sm:$0xf]
    %v87 = vld [vmem:[#allocation3 + $0x8] sm:$0xf]
    %v88 = vld [vmem:[#allocation3 + $0xc] sm:$0xf]
    %v89 = vld [vmem:[#allocation3 + $0x10] sm:$0xf]
    %v90 = vld [vmem:[#allocation3 + $0x14] sm:$0xf]
    %v91 = vld [vmem:[#allocation3 + $0x18] sm:$0xf]
    %v92 = vld [vmem:[#allocation3 + $0x1c] sm:$0xf]
    %v93 = vld [vmem:[#allocation3 + $0x20] sm:$0xf]
    %v94 = vld [vmem:[#allocation3 + $0x24] sm:$0xf]
    %v95 = vld [vmem:[#allocation3 + $0x28] sm:$0xf]
    %v96 = vld [vmem:[#allocation3 + $0x2c] sm:$0xf]
    %v97 = vld [vmem:[#allocation3 + $0x30] sm:$0xf]
    %v98 = vld [vmem:[#allocation3 + $0x34] sm:$0xf]
    %v99 = vld [vmem:[#allocation3 + $0x38] sm:$0xf]
    %v100 = vld [vmem:[#allocation3 + $0x3c] sm:$0xf]
    %v101 = vld [vmem:[#allocation8] sm:$0xf]
    %v102 = vld [vmem:[#allocation8 + $0x4] sm:$0xf]
    %v103 = vld [vmem:[#allocation8 + $0x8] sm:$0xf]
    %v104 = vld [vmem:[#allocation8 + $0xc] sm:$0xf]
    %v105 = vld [vmem:[#allocation8 + $0x10] sm:$0xf]
    %v106 = vld [vmem:[#allocation8 + $0x14] sm:$0xf]
    %v107 = vld [vmem:[#allocation8 + $0x18] sm:$0xf]
    %v108 = vld [vmem:[#allocation8 + $0x1c] sm:$0xf]
    %v109 = vld [vmem:[#allocation8 + $0x20] sm:$0xf]
    %v110 = vld [vmem:[#allocation8 + $0x24] sm:$0xf]
    %v111 = vld [vmem:[#allocation8 + $0x28] sm:$0xf]
    %v112 = vld [vmem:[#allocation8 + $0x2c] sm:$0xf]
    %v113 = vld [vmem:[#allocation8 + $0x30] sm:$0xf]
    %v114 = vld [vmem:[#allocation8 + $0x34] sm:$0xf]
    %v115 = vld [vmem:[#allocation8 + $0x38] sm:$0xf]
    %v116 = vld [vmem:[#allocation8 + $0x3c] sm:$0xf]
    %v133 = vunpack.c.l.b16 %v85
    %v134 = vunpack.c.l.b16 %v86
    %v135 = vunpack.c.l.b16 %v87
    %v136 = vunpack.c.l.b16 %v88
    %v137 = vunpack.c.l.b16 %v89
    %v138 = vunpack.c.l.b16 %v90
    %v139 = vunpack.c.l.b16 %v91
    %v140 = vunpack.c.l.b16 %v92
    %v141 = vunpack.c.l.b16 %v93
    %v142 = vunpack.c.l.b16 %v94
    %v143 = vunpack.c.l.b16 %v95
    %v144 = vunpack.c.l.b16 %v96
    %v145 = vunpack.c.l.b16 %v97
    %v146 = vunpack.c.l.b16 %v98
    %v147 = vunpack.c.l.b16 %v99
    %v148 = vunpack.c.l.b16 %v100
    %v149 = vpack.c.b16 %v134, %v133
    %v150 = vpack.c.b16 %v136, %v135
    %v151 = vpack.c.b16 %v138, %v137
    %v152 = vpack.c.b16 %v140, %v139
    %v153 = vpack.c.b16 %v142, %v141
    %v154 = vpack.c.b16 %v144, %v143
    %v155 = vpack.c.b16 %v146, %v145
    %v156 = vpack.c.b16 %v148, %v147
    %v181 = vunpack.c.l.b16 %v101
    %v182 = vunpack.c.l.b16 %v102
    %v183 = vunpack.c.l.b16 %v103
    %v184 = vunpack.c.l.b16 %v104
    %v185 = vunpack.c.l.b16 %v105
    %v186 = vunpack.c.l.b16 %v106
    %v187 = vunpack.c.l.b16 %v107
    %v188 = vunpack.c.l.b16 %v108
    %v189 = vunpack.c.l.b16 %v109
    %v190 = vunpack.c.l.b16 %v110
    %v191 = vunpack.c.l.b16 %v111
    %v192 = vunpack.c.l.b16 %v112
    %v193 = vunpack.c.l.b16 %v113
    %v194 = vunpack.c.l.b16 %v114
    %v195 = vunpack.c.l.b16 %v115
    %v196 = vunpack.c.l.b16 %v116
    %v197 = vpack.c.b16 %v182, %v181
    %v198 = vpack.c.b16 %v184, %v183
    %v199 = vpack.c.b16 %v186, %v185
    %v200 = vpack.c.b16 %v188, %v187
    %v201 = vpack.c.b16 %v190, %v189
    %v202 = vpack.c.b16 %v192, %v191
    %v203 = vpack.c.b16 %v194, %v193
    %v204 = vpack.c.b16 %v196, %v195
    %213 = vmatpush.bf16.msra.mxu0 %v204
    %214 = vmatpush.bf16.msra.mxu0 %v203
    %215 = vmatpush.bf16.msra.mxu0 %v202
    %216 = vmatpush.bf16.msra.mxu0 %v201
    %217 = vmatpush.bf16.msra.mxu0 %v200
    %218 = vmatpush.bf16.msra.mxu0 %v199
    %219 = vmatpush.bf16.msra.mxu0 %v198
    %220 = vmatpush.bf16.msra.mxu0 %v197
    %221 = vmatmul.bf16.gmra.mxu0 %v149
    %v222 = vpop.f32.mrf.mxu0
    %v223 = vadd.f32 0.0, %v222
    %v224 = vpop.f32.mrf.mxu0
    %v225 = vadd.f32 0.0, %v224
    %226 = vmatmul.bf16.gmra.mxu0 %v150
    %v227 = vpop.f32.mrf.mxu0
    %v228 = vadd.f32 0.0, %v227
    %v229 = vpop.f32.mrf.mxu0
    %v230 = vadd.f32 0.0, %v229
    %231 = vmatmul.bf16.gmra.mxu0 %v151
    %v232 = vpop.f32.mrf.mxu0
    %v233 = vadd.f32 0.0, %v232
    %v234 = vpop.f32.mrf.mxu0
    %v235 = vadd.f32 0.0, %v234
    %236 = vmatmul.bf16.gmra.mxu0 %v152
    %v237 = vpop.f32.mrf.mxu0
    %v238 = vadd.f32 0.0, %v237
    %v239 = vpop.f32.mrf.mxu0
    %v240 = vadd.f32 0.0, %v239
    %241 = vmatmul.bf16.gmra.mxu0 %v153
    %v242 = vpop.f32.mrf.mxu0
    %v243 = vadd.f32 0.0, %v242
    %v244 = vpop.f32.mrf.mxu0
    %v245 = vadd.f32 0.0, %v244
    %246 = vmatmul.bf16.gmra.mxu0 %v154
    %v247 = vpop.f32.mrf.mxu0
    %v248 = vadd.f32 0.0, %v247
    %v249 = vpop.f32.mrf.mxu0
    %v250 = vadd.f32 0.0, %v249
    %251 = vmatmul.bf16.gmra.mxu0 %v155
    %v252 = vpop.f32.mrf.mxu0
    %v253 = vadd.f32 0.0, %v252
    %v254 = vpop.f32.mrf.mxu0
    %v255 = vadd.f32 0.0, %v254
    %256 = vmatmul.bf16.gmra.mxu0 %v156
    %v257 = vpop.f32.mrf.mxu0
    %v258 = vadd.f32 0.0, %v257
    %v259 = vpop.f32.mrf.mxu0
    %v260 = vadd.f32 0.0, %v259
    %261 = vdwg.mxu0
    %v262 = vld [vmem:[#allocation2] sm:$0xff]
    %v263 = vld [vmem:[#allocation2 + $0x8] sm:$0xff]
    %v264 = vld [vmem:[#allocation2 + $0x10] sm:$0xff]
    %v265 = vld [vmem:[#allocation2 + $0x18] sm:$0xff]
    %v266 = vld [vmem:[#allocation2 + $0x20] sm:$0xff]
    %v267 = vld [vmem:[#allocation2 + $0x28] sm:$0xff]
    %v268 = vld [vmem:[#allocation2 + $0x30] sm:$0xff]
    %v269 = vld [vmem:[#allocation2 + $0x38] sm:$0xff]
    %v270 = vld [vmem:[#allocation2 + $0x40] sm:$0xff]
    %v271 = vld [vmem:[#allocation2 + $0x48] sm:$0xff]
    %v272 = vld [vmem:[#allocation2 + $0x50] sm:$0xff]
    %v273 = vld [vmem:[#allocation2 + $0x58] sm:$0xff]
    %v274 = vld [vmem:[#allocation2 + $0x60] sm:$0xff]
    %v275 = vld [vmem:[#allocation2 + $0x68] sm:$0xff]
    %v276 = vld [vmem:[#allocation2 + $0x70] sm:$0xff]
    %v277 = vld [vmem:[#allocation2 + $0x78] sm:$0xff]
    %v278 = vld [vmem:[#allocation6] sm:$0xf]
    %v279 = vld [vmem:[#allocation6 + $0x4] sm:$0xf]
    %v280 = vld [vmem:[#allocation6 + $0x8] sm:$0xf]
    %v281 = vld [vmem:[#allocation6 + $0xc] sm:$0xf]
    %v282 = vld [vmem:[#allocation6 + $0x10] sm:$0xf]
    %v283 = vld [vmem:[#allocation6 + $0x14] sm:$0xf]
    %v284 = vld [vmem:[#allocation6 + $0x18] sm:$0xf]
    %v285 = vld [vmem:[#allocation6 + $0x1c] sm:$0xf]
    %v286 = vld [vmem:[#allocation6 + $0x20] sm:$0xf]
    %v287 = vld [vmem:[#allocation6 + $0x24] sm:$0xf]
    %v288 = vld [vmem:[#allocation6 + $0x28] sm:$0xf]
    %v289 = vld [vmem:[#allocation6 + $0x2c] sm:$0xf]
    %v290 = vld [vmem:[#allocation6 + $0x30] sm:$0xf]
    %v291 = vld [vmem:[#allocation6 + $0x34] sm:$0xf]
    %v292 = vld [vmem:[#allocation6 + $0x38] sm:$0xf]
    %v293 = vld [vmem:[#allocation6 + $0x3c] sm:$0xf]
    %v294 = vpack.c.bf16 %v225, %v223
    %v295 = vpack.c.bf16 %v230, %v228
    %v296 = vpack.c.bf16 %v235, %v233
    %v297 = vpack.c.bf16 %v240, %v238
    %v298 = vpack.c.bf16 %v245, %v243
    %v299 = vpack.c.bf16 %v250, %v248
    %v300 = vpack.c.bf16 %v255, %v253
    %v301 = vpack.c.bf16 %v260, %v258
    %v318 = vunpack.c.l.b16 %v278
    %v319 = vunpack.c.l.b16 %v279
    %v320 = vunpack.c.l.b16 %v280
    %v321 = vunpack.c.l.b16 %v281
    %v322 = vunpack.c.l.b16 %v282
    %v323 = vunpack.c.l.b16 %v283
    %v324 = vunpack.c.l.b16 %v284
    %v325 = vunpack.c.l.b16 %v285
    %v326 = vunpack.c.l.b16 %v286
    %v327 = vunpack.c.l.b16 %v287
    %v328 = vunpack.c.l.b16 %v288
    %v329 = vunpack.c.l.b16 %v289
    %v330 = vunpack.c.l.b16 %v290
    %v331 = vunpack.c.l.b16 %v291
    %v332 = vunpack.c.l.b16 %v292
    %v333 = vunpack.c.l.b16 %v293
    %v334 = vpack.c.b16 %v319, %v318
    %v335 = vpack.c.b16 %v321, %v320
    %v336 = vpack.c.b16 %v323, %v322
    %v337 = vpack.c.b16 %v325, %v324
    %v338 = vpack.c.b16 %v327, %v326
    %v339 = vpack.c.b16 %v329, %v328
    %v340 = vpack.c.b16 %v331, %v330
    %v341 = vpack.c.b16 %v333, %v332
    %350 = vmatpush.bf16.msra.mxu0 %v301
    %351 = vmatpush.bf16.msra.mxu0 %v300
    %352 = vmatpush.bf16.msra.mxu0 %v299
    %353 = vmatpush.bf16.msra.mxu0 %v298
    %354 = vmatpush.bf16.msra.mxu0 %v297
    %355 = vmatpush.bf16.msra.mxu0 %v296
    %356 = vmatpush.bf16.msra.mxu0 %v295
    %357 = vmatpush.bf16.msra.mxu0 %v294
    %358 = vmatmul.bf16.gmra.mxu0 %v334
    %v359 = vpop.f32.mrf.mxu0
    %v360 = vadd.f32 0.0, %v359
    %v361 = vpop.f32.mrf.mxu0
    %v362 = vadd.f32 0.0, %v361
    %363 = vmatmul.bf16.gmra.mxu0 %v335
    %v364 = vpop.f32.mrf.mxu0
    %v365 = vadd.f32 0.0, %v364
    %v366 = vpop.f32.mrf.mxu0
    %v367 = vadd.f32 0.0, %v366
    %368 = vmatmul.bf16.gmra.mxu0 %v336
    %v369 = vpop.f32.mrf.mxu0
    %v370 = vadd.f32 0.0, %v369
    %v371 = vpop.f32.mrf.mxu0
    %v372 = vadd.f32 0.0, %v371
    %373 = vmatmul.bf16.gmra.mxu0 %v337
    %v374 = vpop.f32.mrf.mxu0
    %v375 = vadd.f32 0.0, %v374
    %v376 = vpop.f32.mrf.mxu0
    %v377 = vadd.f32 0.0, %v376
    %378 = vmatmul.bf16.gmra.mxu0 %v338
    %v379 = vpop.f32.mrf.mxu0
    %v380 = vadd.f32 0.0, %v379
    %v381 = vpop.f32.mrf.mxu0
    %v382 = vadd.f32 0.0, %v381
    %383 = vmatmul.bf16.gmra.mxu0 %v339
    %v384 = vpop.f32.mrf.mxu0
    %v385 = vadd.f32 0.0, %v384
    %v386 = vpop.f32.mrf.mxu0
    %v387 = vadd.f32 0.0, %v386
    %388 = vmatmul.bf16.gmra.mxu0 %v340
    %v389 = vpop.f32.mrf.mxu0
    %v390 = vadd.f32 0.0, %v389
    %v391 = vpop.f32.mrf.mxu0
    %v392 = vadd.f32 0.0, %v391
    %393 = vmatmul.bf16.gmra.mxu0 %v341
    %v394 = vpop.f32.mrf.mxu0
    %v395 = vadd.f32 0.0, %v394
    %v396 = vpop.f32.mrf.mxu0
    %v397 = vadd.f32 0.0, %v396
    %398 = vdwg.mxu0
    %v399 = vadd.f32 %v262, %v360
    %v400 = vadd.f32 %v263, %v362
    %v401 = vadd.f32 %v264, %v365
    %v402 = vadd.f32 %v265, %v367
    %v403 = vadd.f32 %v266, %v370
    %v404 = vadd.f32 %v267, %v372
    %v405 = vadd.f32 %v268, %v375
    %v406 = vadd.f32 %v269, %v377
    %v407 = vadd.f32 %v270, %v380
    %v408 = vadd.f32 %v271, %v382
    %v409 = vadd.f32 %v272, %v385
    %v410 = vadd.f32 %v273, %v387
    %v411 = vadd.f32 %v274, %v390
    %v412 = vadd.f32 %v275, %v392
    %v413 = vadd.f32 %v276, %v395
    %v414 = vadd.f32 %v277, %v397
    %415 = vst [vmem:[#allocation2] sm:$0xff] %v399
    %416 = vst [vmem:[#allocation2 + $0x8] sm:$0xff] %v400
    %417 = vst [vmem:[#allocation2 + $0x10] sm:$0xff] %v401
    %418 = vst [vmem:[#allocation2 + $0x18] sm:$0xff] %v402
    %419 = vst [vmem:[#allocation2 + $0x20] sm:$0xff] %v403
    %420 = vst [vmem:[#allocation2 + $0x28] sm:$0xff] %v404
    %421 = vst [vmem:[#allocation2 + $0x30] sm:$0xff] %v405
    %422 = vst [vmem:[#allocation2 + $0x38] sm:$0xff] %v406
    %423 = vst [vmem:[#allocation2 + $0x40] sm:$0xff] %v407
    %424 = vst [vmem:[#allocation2 + $0x48] sm:$0xff] %v408
    %425 = vst [vmem:[#allocation2 + $0x50] sm:$0xff] %v409
    %426 = vst [vmem:[#allocation2 + $0x58] sm:$0xff] %v410
    %427 = vst [vmem:[#allocation2 + $0x60] sm:$0xff] %v411
    %428 = vst [vmem:[#allocation2 + $0x68] sm:$0xff] %v412
    %429 = vst [vmem:[#allocation2 + $0x70] sm:$0xff] %v413
    %430 = vst [vmem:[#allocation2 + $0x78] sm:$0xff] %v414
    // Predicated region
    $region34: #{tpu_custom_call.1} parent=1 // pred_check
      %p431 = pneg %p65
    $region35: #{tpu_custom_call.1} parent=1 // pred_check_branch
      %433 = sbr.rel (%p431) target = $region37
    $region36: #{tpu_custom_call.1} parent=1 // pred_region
      %v434 = vld [vmem:[#allocation2] sm:$0xff]
      %v435 = vld [vmem:[#allocation2 + $0x8] sm:$0xff]
      %v436 = vld [vmem:[#allocation2 + $0x10] sm:$0xff]
      %v437 = vld [vmem:[#allocation2 + $0x18] sm:$0xff]
      %v438 = vld [vmem:[#allocation2 + $0x20] sm:$0xff]
      %v439 = vld [vmem:[#allocation2 + $0x28] sm:$0xff]
      %v440 = vld [vmem:[#allocation2 + $0x30] sm:$0xff]
      %v441 = vld [vmem:[#allocation2 + $0x38] sm:$0xff]
      %v442 = vld [vmem:[#allocation2 + $0x40] sm:$0xff]
      %v443 = vld [vmem:[#allocation2 + $0x48] sm:$0xff]
      %v444 = vld [vmem:[#allocation2 + $0x50] sm:$0xff]
      %v445 = vld [vmem:[#allocation2 + $0x58] sm:$0xff]
      %v446 = vld [vmem:[#allocation2 + $0x60] sm:$0xff]
      %v447 = vld [vmem:[#allocation2 + $0x68] sm:$0xff]
      %v448 = vld [vmem:[#allocation2 + $0x70] sm:$0xff]
      %v449 = vld [vmem:[#allocation2 + $0x78] sm:$0xff]
      %v450 = vld [vmem:[%s3] sm:$0x1]
      %v452 = vperm.slane %v450, 0
      %v454 = vadd.f32 %v434, %v452
      %v455 = vadd.f32 %v435, %v452
      %v456 = vadd.f32 %v436, %v452
      %v457 = vadd.f32 %v437, %v452
      %v458 = vadd.f32 %v438, %v452
      %v459 = vadd.f32 %v439, %v452
      %v460 = vadd.f32 %v440, %v452
      %v461 = vadd.f32 %v441, %v452
      %v462 = vadd.f32 %v442, %v452
      %v463 = vadd.f32 %v443, %v452
      %v464 = vadd.f32 %v444, %v452
      %v465 = vadd.f32 %v445, %v452
      %v466 = vadd.f32 %v446, %v452
      %v467 = vadd.f32 %v447, %v452
      %v468 = vadd.f32 %v448, %v452
      %v469 = vadd.f32 %v449, %v452
      %470 = vst [vmem:[#allocation9] sm:$0xff] %v454
      %471 = vst [vmem:[#allocation9 + $0x8] sm:$0xff] %v455
      %472 = vst [vmem:[#allocation9 + $0x10] sm:$0xff] %v456
      %473 = vst [vmem:[#allocation9 + $0x18] sm:$0xff] %v457
      %474 = vst [vmem:[#allocation9 + $0x20] sm:$0xff] %v458
      %475 = vst [vmem:[#allocation9 + $0x28] sm:$0xff] %v459
      %476 = vst [vmem:[#allocation9 + $0x30] sm:$0xff] %v460
      %477 = vst [vmem:[#allocation9 + $0x38] sm:$0xff] %v461
      %478 = vst [vmem:[#allocation9 + $0x40] sm:$0xff] %v462
      %479 = vst [vmem:[#allocation9 + $0x48] sm:$0xff] %v463
      %480 = vst [vmem:[#allocation9 + $0x50] sm:$0xff] %v464
      %481 = vst [vmem:[#allocation9 + $0x58] sm:$0xff] %v465
      %482 = vst [vmem:[#allocation9 + $0x60] sm:$0xff] %v466
      %483 = vst [vmem:[#allocation9 + $0x68] sm:$0xff] %v467
      %484 = vst [vmem:[#allocation9 + $0x70] sm:$0xff] %v468
      %485 = vst [vmem:[#allocation9 + $0x78] sm:$0xff] %v469
    $region37: #{tpu_custom_call.1} parent=1 // pred_fallthru
      _
    // Predicated region
    $region38: #{tpu_custom_call.1} parent=1 // pred_check
      _
    $region39: #{tpu_custom_call.1} parent=1 // pred_check_branch
      %487 = sbr.rel (0) target = $region41
    $region40: #{tpu_custom_call.1} parent=1 // pred_region
      %489 = vsyncadd [#allocation5], 0
      %s490 = sshll.u32 [#allocation9], 4
      %s491 = int_to_ptr.vmem [resolvable:$true] %s490
      %s492 = sshll.u32 %s4, 4
      %s493 = int_to_ptr.hbm [resolvable:$true] %s492
      %498 = dma.vmem_to_hbm [thread:$0]  %s491, 2048, %s493, [#allocation5], 128, 128, 8
    $region41: #{tpu_custom_call.1} parent=1 // pred_fallthru
      _
    // Predicated region
    $region42: #{tpu_custom_call.1} parent=1 // pred_check
      _
    $region43: #{tpu_custom_call.1} parent=1 // pred_check_branch
      %500 = sbr.rel (0) target = $region45
    $region44: #{tpu_custom_call.1} parent=1 // pred_region
      %502 = dma.done [#allocation5], 2048
    $region45: #{tpu_custom_call.1} parent=1 // pred_fallthru
      _
    %503 = vsyncpa [#allocation4], 1
    %504 = vsyncpa [#allocation7], 1
    %505 = vsyncpa [#allocation5], 1

</llo_original>
